<compile_context>
chip_gen: v6e
topology: v6e:2x2x1
jax: 0.10.0
libtpu: 0.0.40
codegen_flags: <defaults>
</compile_context>

<pallas_src>
import numpy as np
import jax
import jax.numpy as jnp
from jax import lax
from jax.experimental import pallas as pl
from jax.experimental.pallas import tpu as pltpu

_EPS = 1e-12            # F.normalize eps (p=2)
_EPS2 = _EPS * _EPS
_NEG_BIG = -1e30        # mask value; exp(NEG_BIG - m) underflows to exactly 0
_LANE = 128


def _round_up(x, m):
    return (x + m - 1) // m * m


def _vmem_capacity_bytes():
    """Per-core VMEM capacity; conservative fallback if the query is unavailable."""
    try:
        return int(pltpu.get_tpu_info().vmem_capacity_bytes)
    except Exception:
        return 64 * 2**20          # v7x per-TensorCore VMEM (smallest current part)


def _l2_normalize(x):
    # x / max(||x||, eps) == x * rsqrt(max(||x||^2, eps^2))
    ss = jnp.sum(x * x, axis=-1, keepdims=True)
    return x * lax.rsqrt(jnp.maximum(ss, _EPS2))


# -----------------------------------------------------------------------------
# Path 1: single-block kernel (small / moderate N; whole problem in VMEM)
# -----------------------------------------------------------------------------
def _make_single_block_kernel(n_pair: int, angle_bound: float):
    c2 = 2.0 * (1.0 + float(angle_bound))

    def kernel(qs_ref, a_ref, p_ref, c_ref, o_ref):
        qs = qs_ref[...]                                            # (N, Dp) bf16
        # two (N, N) halves instead of materializing kn = concat([a, p]) (2N, Dp)
        xa = lax.dot_general(qs, a_ref[...], (((1,), (1,)), ((), ())),
                             preferred_element_type=jnp.float32)    # (N, N)
        xp = lax.dot_general(qs, p_ref[...], (((1,), (1,)), ((), ())),
                             preferred_element_type=jnp.float32)    # (N, N)

        # single lane-iota / row-iota diagonal mask (no full (N,2N) int planes)
        row = lax.broadcasted_iota(jnp.int32, (n_pair, 1), 0)
        col = lax.broadcasted_iota(jnp.int32, (1, n_pair), 1)
        off_diag = col != row
        xa = jnp.where(off_diag, xa, _NEG_BIG)
        xp = jnp.where(off_diag, xp, _NEG_BIG)

        m = jnp.maximum(jnp.max(xa, axis=1, keepdims=True),
                        jnp.max(xp, axis=1, keepdims=True))          # (N, 1)
        s = (jnp.sum(jnp.exp(xa - m), axis=1, keepdims=True)
             + jnp.sum(jnp.exp(xp - m), axis=1, keepdims=True))      # (N, 1)

        t = m - c2 * c_ref[...]                                      # == torch.max(v)
        res = t + jnp.log(jnp.exp(-t) + s)
        o_ref[0, 0] = jnp.sum(res) / jnp.float32(n_pair)

    return kernel


def _angular_loss_single_block(qs, a_bf, p_bf, c, n_pair, angle_bound, vmem_cap):
    d_pad = qs.shape[1]
    # inputs (bf16) + xa/xp + exp/where temporaries + headroom
    est = 3 * n_pair * d_pad * 2 + 8 * n_pair * n_pair * 4 + (8 << 20)
    vmem_limit = int(min(max(est, 32 << 20), int(0.85 * vmem_cap)))
    out = pl.pallas_call(
        _make_single_block_kernel(n_pair, angle_bound),
        out_shape=jax.ShapeDtypeStruct((1, 1), jnp.float32),
        in_specs=[pl.BlockSpec(memory_space=pltpu.MemorySpace.VMEM)] * 4,
        out_specs=pl.BlockSpec(memory_space=pltpu.MemorySpace.SMEM),
        compiler_params=pltpu.CompilerParams(vmem_limit_bytes=vmem_limit),
    )(qs, a_bf, p_bf, c)
    return out[0, 0]


# -----------------------------------------------------------------------------
# Path 2: tiled online-logsumexp kernel (large N; i "parallel", j "arbitrary")
# -----------------------------------------------------------------------------
def _make_tiled_kernel(n_pair: int, n_valid_cols: int, angle_bound: float,
                       ti: int, tj: int, kn_resident: bool, has_col_pad: bool):
    c2 = 2.0 * (1.0 + float(angle_bound))

    def kernel(qs_ref, c_ref, kn_ref, res_ref, m_sc, l_sc):
        i = pl.program_id(0)
        j = pl.program_id(1)
        nj = pl.num_programs(1)

        @pl.when(j == 0)
        def _():
            m_sc[...] = jnp.full((ti, 1), _NEG_BIG, jnp.float32)
            l_sc[...] = jnp.zeros((ti, 1), jnp.float32)

        if kn_resident:
            # kn lives fully in VMEM; just slice the current column block.
            col0 = pl.multiple_of(j * tj, tj)
            kn_blk = kn_ref[pl.ds(col0, tj), :]
        else:
            kn_blk = kn_ref[...]                                     # (tj, Dp) block

        # fused (ti, Dp) x (Dp, tj) Gram block; contraction on last dims (no .T)
        x = lax.dot_general(qs_ref[...], kn_blk, (((1,), (1,)), ((), ())),
                            preferred_element_type=jnp.float32)      # (ti, tj) f32

        def update(xv):
            # flash-style running max / running sum over the j axis
            m_prev = m_sc[...]
            m_new = jnp.maximum(m_prev, jnp.max(xv, axis=1, keepdims=True))
            l_sc[...] = (jnp.exp(m_prev - m_new) * l_sc[...]
                         + jnp.sum(jnp.exp(xv - m_new), axis=1, keepdims=True))
            m_sc[...] = m_new

        # scalar band test: does this (i, j) block touch either self-pair
        # diagonal (or the zero-padded column tail)?  Mask work only runs there.
        row0 = i * ti
        col_lo = j * tj
        col_hi = col_lo + tj
        band = (((col_lo < row0 + ti) & (row0 < col_hi)) |
                ((col_lo < row0 + ti + n_pair) & (row0 + n_pair < col_hi)))
        needs_mask = (band | (j == nj - 1)) if has_col_pad else band

        @pl.when(needs_mask)
        def _():
            grow = row0 + lax.broadcasted_iota(jnp.int32, (ti, 1), 0)
            gcol = col_lo + lax.broadcasted_iota(jnp.int32, (1, tj), 1)
            valid = (gcol != grow) & (gcol != grow + n_pair)
            if has_col_pad:
                valid = valid & (gcol < n_valid_cols)
            update(jnp.where(valid, x, _NEG_BIG))

        @pl.when(jnp.logical_not(needs_mask))
        def _():
            update(x)

        @pl.when(j == nj - 1)
        def _():
            t = m_sc[...] - c2 * c_ref[...]
            res_ref[...] = t + jnp.log(jnp.exp(-t) + l_sc[...])

    return kernel


def _angular_loss_tiled(qs, kn, c, n_pair, angle_bound, ti, tj, vmem_cap,
                        kn_resident=None):
    d_pad = qs.shape[1]
    n_valid_cols = kn.shape[0]                      # == 2 * n_pair
    n_rows = _round_up(n_pair, ti)
    n_cols = _round_up(n_valid_cols, tj)

    # zero-pad to the tile grid (padded rows are sliced off before the mean;
    # padded kn columns are masked inside the kernel's tail block)
    if n_rows != n_pair:
        qs = jnp.pad(qs, ((0, n_rows - n_pair), (0, 0)))
        c = jnp.pad(c, ((0, n_rows - n_pair), (0, 0)))
    if n_cols != n_valid_cols:
        kn = jnp.pad(kn, ((0, n_cols - n_valid_cols), (0, 0)))

    kn_bytes = n_cols * d_pad * 2                   # bf16
    if kn_resident is None:
        kn_resident = kn_bytes <= min(24 << 20, int(0.30 * vmem_cap))

    ni = n_rows // ti
    nj = n_cols // tj
    has_col_pad = n_cols != n_valid_cols

    if kn_resident:
        # single HBM read; every i-block reuses the VMEM-resident copy
        kn_spec = pl.BlockSpec(memory_space=pltpu.MemorySpace.VMEM)
        kn_vmem = kn_bytes
    else:
        # only stride-varying operand -> deepen its pipeline to hide the DMA
        kn_spec = pl.BlockSpec((tj, d_pad), lambda i, j: (j, 0),
                               pipeline_mode=pl.Buffered(3))
        kn_vmem = 3 * tj * d_pad * 2

    est = kn_vmem + 2 * ti * d_pad * 2 + 4 * ti * tj * 4 + 8 * ti * 4 + (8 << 20)
    vmem_limit = int(min(max(est, 32 << 20), int(0.85 * vmem_cap)))

    grid_spec = pltpu.PrefetchScalarGridSpec(
        num_scalar_prefetch=0,
        grid=(ni, nj),
        in_specs=[pl.BlockSpec((ti, d_pad), lambda i, j: (i, 0)),   # qs (bf16)
                  pl.BlockSpec((ti, 1), lambda i, j: (i, 0)),       # c  (f32)
                  kn_spec],                                          # kn (bf16)
        out_specs=pl.BlockSpec((ti, 1), lambda i, j: (i, 0)),
        scratch_shapes=[pltpu.VMEM((ti, 1), jnp.float32),            # running max
                        pltpu.VMEM((ti, 1), jnp.float32)],           # running sum
    )
    res = pl.pallas_call(
        _make_tiled_kernel(n_pair, n_valid_cols, angle_bound, ti, tj,
                           kn_resident, has_col_pad),
        out_shape=jax.ShapeDtypeStruct((n_rows, 1), jnp.float32),
        grid_spec=grid_spec,
        compiler_params=pltpu.CompilerParams(
            dimension_semantics=("parallel", "arbitrary"),
            vmem_limit_bytes=vmem_limit),
    )(qs, c, kn)
    # final mean stays outside the kernel (parallel i axis never shares a scalar)
    return jnp.mean(res[:n_pair, 0])


# -----------------------------------------------------------------------------
# Public wrapper
# -----------------------------------------------------------------------------
def angular_loss(anchors: jax.Array, positives: jax.Array, alpha_deg: float = 45.0,
                 *, block_i=None, block_j=None, kn_resident=None):
    """Pallas implementation of AngularLoss.forward((anchors, positives))."""
    n_pair, d = anchors.shape
    if n_pair < 2:
        raise ValueError("AngularLoss needs at least 2 pairs (N >= 2).")
    angle_bound = float(np.tan(np.float32(np.deg2rad(alpha_deg))) ** 2)
    c1 = 4.0 * angle_bound

    a = anchors.astype(jnp.float32)
    p = positives.astype(jnp.float32)
    d_pad = _round_up(d, _LANE)
    if d_pad != d:
        # zero padding of the embedding dim changes neither norms nor dot products
        pad = ((0, 0), (0, d_pad - d))
        a = jnp.pad(a, pad)
        p = jnp.pad(p, pad)

    # One-time prep in plain XLA (hoisted out of the kernel hot loop):
    #   normalized embeddings, the c1-folded LHS, and the a.p row bias (f32).
    a_n = _l2_normalize(a)
    p_n = _l2_normalize(p)
    c = jnp.sum(a_n * p_n, axis=-1, keepdims=True)          # (N, 1) f32
    qs = (c1 * (a_n + p_n)).astype(jnp.bfloat16)            # (N, Dp) bf16 MXU operand

    vmem_cap = _vmem_capacity_bytes()

    use_tiled = (block_i is not None) or (block_j is not None) or (n_pair > 512)
    if not use_tiled:
        return _angular_loss_single_block(
            qs, a_n.astype(jnp.bfloat16), p_n.astype(jnp.bfloat16), c,
            n_pair, angle_bound, vmem_cap)

    kn = jnp.concatenate([a_n, p_n], axis=0).astype(jnp.bfloat16)    # (2N, Dp) bf16
    if block_j is None and block_i is not None:
        block_j = block_i
    tj = 256 if block_j is None else _round_up(int(block_j), 16)
    if block_i is None:
        kn_fits = (_round_up(2 * n_pair, tj) * d_pad * 2
                   <= min(24 << 20, int(0.30 * vmem_cap)))
        # streamed kn -> raise i-tile to boost arithmetic intensity per kn byte
        ti = 256 if kn_fits else 512
    else:
        ti = _round_up(int(block_i), 16)
    return _angular_loss_tiled(qs, kn, c, n_pair, angle_bound, ti, tj,
                               vmem_cap, kn_resident)


def angular_loss_ref(anchors, positives, alpha_deg: float = 45.0):
    """Pure-JAX transcription of the PyTorch forward, for verification."""
    angle_bound = jnp.float32(np.tan(np.float32(np.deg2rad(alpha_deg))) ** 2)
    a = anchors / jnp.maximum(jnp.linalg.norm(anchors, axis=-1, keepdims=True), _EPS)
    p = positives / jnp.maximum(jnp.linalg.norm(positives, axis=-1, keepdims=True), _EPS)
    n = a.shape[0]
    all_pairs = np.array([[j for j in range(n) if j != i] for i in range(n)])
    negatives = jnp.concatenate([a[all_pairs], p[all_pairs]], axis=1)   # (N, 2(N-1), D)
    anc = a[:, None, :]
    pos = p[:, None, :]
    hp = lax.Precision.HIGHEST
    inter = (4.0 * angle_bound
             * jnp.einsum('nij,nkj->nik', anc + pos, negatives, precision=hp)
             - 2.0 * (1.0 + angle_bound)
             * jnp.einsum('nij,nkj->nik', anc, pos, precision=hp))
    t = jnp.max(inter, axis=2)                       # (N, 1)
    inter = jnp.exp(inter - t[:, None])              # t.unsqueeze(1) -> (N,1,1)
    inter = jnp.log(jnp.exp(-t) + jnp.sum(inter, axis=2))
    return jnp.mean(t + inter)


if __name__ == "__main__":
    keys = jax.random.split(jax.random.PRNGKey(0), 6)
    # tolerance covers the bf16 MXU operand cast (XLA's default f32 matmul
    # precision truncates to bf16 on the MXU anyway); reference uses HIGHEST.
    TOL = dict(rtol=1e-2, atol=1e-2)

    # 1) small single-block path
    N, D = 8, 32
    anchors = jax.random.normal(keys[0], (N, D), dtype=jnp.float32)
    positives = jax.random.normal(keys[1], (N, D), dtype=jnp.float32)
    loss = angular_loss(anchors, positives, alpha_deg=45.0)
    jax.block_until_ready(loss)
    ref = angular_loss_ref(anchors, positives, alpha_deg=45.0)
    np.testing.assert_allclose(np.asarray(loss), np.asarray(ref), **TOL)

    # 2) tiled path, VMEM-resident kn, non-multiple N (exercises row/column
    #    padding plus band-masked, tail-masked AND unmasked j blocks)
    N2, D2 = 200, 48
    anchors2 = jax.random.normal(keys[2], (N2, D2), dtype=jnp.float32)
    positives2 = jax.random.normal(keys[3], (N2, D2), dtype=jnp.float32)
    loss2 = angular_loss(anchors2, positives2, alpha_deg=45.0,
                         block_i=64, block_j=128)
    jax.block_until_ready(loss2)
    ref2 = angular_loss_ref(anchors2, positives2, alpha_deg=45.0)
    np.testing.assert_allclose(np.asarray(loss2), np.asarray(ref2), **TOL)

    # 3) tiled path with kn streamed from HBM (3-deep pipeline), exact tile fit
    N3, D3 = 256, 64
    anchors3 = jax.random.normal(keys[4], (N3, D3), dtype=jnp.float32)
    positives3 = jax.random.normal(keys[5], (N3, D3), dtype=jnp.float32)
    loss3 = angular_loss(anchors3, positives3, alpha_deg=45.0,
                         block_i=64, block_j=128, kn_resident=False)
    jax.block_until_ready(loss3)
    ref3 = angular_loss_ref(anchors3, positives3, alpha_deg=45.0)
    np.testing.assert_allclose(np.asarray(loss3), np.asarray(ref3), **TOL)

    print("KERNEL_OK")
</pallas_src>

<mosaic_0001>
module attributes {stable_mosaic.version = 11 : i64} {
  func.func @kernel(%arg0: memref<8x128xbf16, #tpu.memory_space<vmem>>, %arg1: memref<8x128xbf16, #tpu.memory_space<vmem>>, %arg2: memref<8x128xbf16, #tpu.memory_space<vmem>>, %arg3: memref<8x1xf32, #tpu.memory_space<vmem>>, %arg4: memref<1x1xf32, #tpu.memory_space<smem>>) attributes {dimension_semantics = [], scalar_prefetch = 0 : i64, scratch_operands = 0 : i64, tpu.core_type = #tpu.core_type<tc>} {
    %c0 = arith.constant 0 : index
    %c0_0 = arith.constant 0 : index
    %0 = vector.load %arg0[%c0, %c0_0] : memref<8x128xbf16, #tpu.memory_space<vmem>>, vector<8x128xbf16>
    %c0_1 = arith.constant 0 : index
    %c0_2 = arith.constant 0 : index
    %1 = vector.load %arg1[%c0_1, %c0_2] : memref<8x128xbf16, #tpu.memory_space<vmem>>, vector<8x128xbf16>
    %cst = arith.constant dense<0.000000e+00> : vector<8x8xf32>
    %2 = tpu.matmul %0, %1, %cst {dimension_numbers = #tpu.dot_dimension_numbers<[1], [1], [0], [0], [0, 0, 1, 0], [], []>} : vector<8x128xbf16>, vector<8x128xbf16>, vector<8x8xf32> -> vector<8x8xf32>
    %c0_3 = arith.constant 0 : index
    %c0_4 = arith.constant 0 : index
    %3 = vector.load %arg2[%c0_3, %c0_4] : memref<8x128xbf16, #tpu.memory_space<vmem>>, vector<8x128xbf16>
    %cst_5 = arith.constant dense<0.000000e+00> : vector<8x8xf32>
    %4 = tpu.matmul %0, %3, %cst_5 {dimension_numbers = #tpu.dot_dimension_numbers<[1], [1], [0], [0], [0, 0, 1, 0], [], []>} : vector<8x128xbf16>, vector<8x128xbf16>, vector<8x8xf32> -> vector<8x8xf32>
    %5 = tpu.iota {dimensions = array<i32: 0>} : vector<8x1xi32>
    %6 = tpu.iota {dimensions = array<i32: 1>} : vector<1x8xi32>
    %7 = vector.broadcast %6 : vector<1x8xi32> to vector<8x8xi32>
    %8 = vector.broadcast %5 : vector<8x1xi32> to vector<8x8xi32>
    %9 = arith.cmpi ne, %7, %8 : vector<8x8xi32>
    %cst_6 = arith.constant -1.000000e+30 : f32
    %10 = vector.broadcast %cst_6 : f32 to vector<8x8xf32>
    %11 = arith.select %9, %2, %10 : vector<8x8xi1>, vector<8x8xf32>
    %cst_7 = arith.constant -1.000000e+30 : f32
    %12 = vector.broadcast %cst_7 : f32 to vector<8x8xf32>
    %13 = arith.select %9, %4, %12 : vector<8x8xi1>, vector<8x8xf32>
    %cst_8 = arith.constant dense<0xFF800000> : vector<8xf32>
    %14 = vector.multi_reduction <maximumf>, %11, %cst_8 [1] : vector<8x8xf32> to vector<8xf32>
    %15 = vector.shape_cast %14 : vector<8xf32> to vector<8x1xf32>
    %cst_9 = arith.constant dense<0xFF800000> : vector<8xf32>
    %16 = vector.multi_reduction <maximumf>, %13, %cst_9 [1] : vector<8x8xf32> to vector<8xf32>
    %17 = vector.shape_cast %16 : vector<8xf32> to vector<8x1xf32>
    %18 = arith.maximumf %15, %17 : vector<8x1xf32>
    %19 = vector.broadcast %18 : vector<8x1xf32> to vector<8x8xf32>
    %20 = arith.subf %11, %19 : vector<8x8xf32>
    %21 = math.exp %20 : vector<8x8xf32>
    %cst_10 = arith.constant dense<0.000000e+00> : vector<8xf32>
    %22 = vector.multi_reduction <add>, %21, %cst_10 [1] : vector<8x8xf32> to vector<8xf32>
    %23 = vector.shape_cast %22 : vector<8xf32> to vector<8x1xf32>
    %24 = vector.broadcast %18 : vector<8x1xf32> to vector<8x8xf32>
    %25 = arith.subf %13, %24 : vector<8x8xf32>
    %26 = math.exp %25 : vector<8x8xf32>
    %cst_11 = arith.constant dense<0.000000e+00> : vector<8xf32>
    %27 = vector.multi_reduction <add>, %26, %cst_11 [1] : vector<8x8xf32> to vector<8xf32>
    %28 = vector.shape_cast %27 : vector<8xf32> to vector<8x1xf32>
    %29 = arith.addf %23, %28 : vector<8x1xf32>
    %c0_12 = arith.constant 0 : index
    %c0_13 = arith.constant 0 : index
    %30 = vector.load %arg3[%c0_12, %c0_13] : memref<8x1xf32, #tpu.memory_space<vmem>>, vector<8x1xf32>
    %cst_14 = arith.constant 4.000000e+00 : f32
    %31 = vector.broadcast %cst_14 : f32 to vector<8x1xf32>
    %32 = arith.mulf %31, %30 : vector<8x1xf32>
    %33 = arith.subf %18, %32 : vector<8x1xf32>
    %cst_15 = arith.constant 0.000000e+00 : f32
    %34 = vector.broadcast %cst_15 : f32 to vector<8x1xf32>
    %35 = arith.subf %34, %33 : vector<8x1xf32>
    %36 = math.exp %35 : vector<8x1xf32>
    %37 = arith.addf %36, %29 : vector<8x1xf32>
    %38 = math.log %37 : vector<8x1xf32>
    %39 = arith.addf %33, %38 : vector<8x1xf32>
    %40 = vector.shape_cast %39 : vector<8x1xf32> to vector<1x8x1xf32>
    %cst_16 = arith.constant dense<0.000000e+00> : vector<1xf32>
    %41 = vector.multi_reduction <add>, %40, %cst_16 [1, 2] : vector<1x8x1xf32> to vector<1xf32>
    %42 = vector.shape_cast %41 : vector<1xf32> to vector<1x1x1xf32>
    %43 = vector.extract %42[0, 0, 0] : f32 from vector<1x1x1xf32>
    %cst_17 = arith.constant 8.000000e+00 : f32
    %44 = arith.divf %43, %cst_17 : f32
    %c0_18 = arith.constant 0 : index
    %c0_19 = arith.constant 0 : index
    %45 = memref.load %arg4[%c0_18, %c0_19] : memref<1x1xf32, #tpu.memory_space<smem>>
    memref.store %44, %arg4[%c0_18, %c0_19] : memref<1x1xf32, #tpu.memory_space<smem>>
    return
  }
}

</mosaic_0001>

<llo_original>
// kernel: tpu_custom_call.1
$region0: #{tpu_custom_call.1}
  #allocation0 [shape = 'u32[]', space=smem, size = 0x4, offset = 0x4, fixed_abs, tag = 'smem constant byte address 0x4 - core index']
  #allocation1 [shape = 'u32[144,128]{1,0:T(1,128)}', space=vmem, size = 0x12000, scoped, tag = 'internal scratch']
  %s0 = inlined_call_operand.vmem [shape: bf16[8,128], index: 0, kind: input, shape index: {}]
  %s1 = inlined_call_operand.vmem [shape: bf16[8,128], index: 1, kind: input, shape index: {}]
  %s2 = inlined_call_operand.vmem [shape: bf16[8,128], index: 2, kind: input, shape index: {}]
  %s3 = inlined_call_operand.vmem [shape: f32[8,1], index: 3, kind: input, shape index: {}]
  %s4 = inlined_call_operand.hbm [shape: f32[1,1], index: 4, kind: output, shape index: {}]
  %s5 = sld [smem:[#allocation0]]
  $region26: #{tpu_custom_call.1} parent=0
    _
  %s7 = ssub.s32 1, %s5
  %s8 = scalar_select 0, %s7, %s5
  $region1: #{tpu_custom_call.1} parent=0
    #allocation2 [shape = 'u8[512]{0}', space=smem, size = 0x200, scoped, tag = 'output window, operand 0, single buffered']
    #allocation3 [shape = 's32[1]{0}', space=sflag, size = 0x4, scoped, tag = 'scoped memory for tpu_custom_call.1']
    %9 = vsyncpa [#allocation3], 0
    // Predicated region
    $region2: #{tpu_custom_call.1} parent=1 // pred_check
      _
    $region3: #{tpu_custom_call.1} parent=1 // pred_check_branch
      %11 = sbr.rel (0) target = $region5
    $region4: #{tpu_custom_call.1} parent=1 // pred_region
      _
    $region5: #{tpu_custom_call.1} parent=1 // pred_fallthru
      _
    // Predicated region
    $region6: #{tpu_custom_call.1} parent=1 // pred_check
      _
    $region7: #{tpu_custom_call.1} parent=1 // pred_check_branch
      %13 = sbr.rel (0) target = $region9
    $region8: #{tpu_custom_call.1} parent=1 // pred_region
      _
    $region9: #{tpu_custom_call.1} parent=1 // pred_fallthru
      _
    // Predicated region
    $region10: #{tpu_custom_call.1} parent=1 // pred_check
      _
    $region11: #{tpu_custom_call.1} parent=1 // pred_check_branch
      %15 = sbr.rel (0) target = $region13
    $region12: #{tpu_custom_call.1} parent=1 // pred_region
      _
    $region13: #{tpu_custom_call.1} parent=1 // pred_fallthru
      _
    // Predicated region
    $region14: #{tpu_custom_call.1} parent=1 // pred_check
      _
    $region15: #{tpu_custom_call.1} parent=1 // pred_check_branch
      %17 = sbr.rel (0) target = $region17
    $region16: #{tpu_custom_call.1} parent=1 // pred_region
      _
    $region17: #{tpu_custom_call.1} parent=1 // pred_fallthru
      _
    %v19 = vld [vmem:[%s0] sm:$0xf]
    %v20 = vld [vmem:[%s1] sm:$0xf]
    %21 = vmatprep.subr.bf16.mxu0 0
    %22 = vmatpush1.bf16.xpose.msra.mxu0 0
    %23 = vmatprep.subr.bf16.mxu0 0
    %24 = vmatpush1.bf16.xpose.msra.mxu0 0
    %25 = vmatprep.subr.bf16.mxu0 0
    %26 = vmatpush1.bf16.xpose.msra.mxu0 0
    %27 = vmatprep.subr.bf16.mxu0 0
    %28 = vmatpush1.bf16.xpose.msra.mxu0 0
    %29 = vmatprep.subr.bf16.mxu0 0
    %30 = vmatpush1.bf16.xpose.msra.mxu0 0
    %31 = vmatprep.subr.bf16.mxu0 0
    %32 = vmatpush1.bf16.xpose.msra.mxu0 0
    %33 = vmatprep.subr.bf16.mxu0 0
    %34 = vmatpush1.bf16.xpose.msra.mxu0 0
    %35 = vmatprep.subr.bf16.mxu0 0
    %36 = vmatpush1.bf16.xpose.msra.mxu0 %v20
    %37 = vmatprep.subr.bf16.mxu0 0
    %38 = vmatpush2.bf16.xpose.msra.mxu0 0
    %39 = vmatprep.subr.bf16.mxu0 0
    %40 = vmatpush2.bf16.xpose.msra.mxu0 0
    %41 = vmatprep.subr.bf16.mxu0 0
    %42 = vmatpush2.bf16.xpose.msra.mxu0 0
    %43 = vmatprep.subr.bf16.mxu0 0
    %44 = vmatpush2.bf16.xpose.msra.mxu0 0
    %45 = vmatprep.subr.bf16.mxu0 0
    %46 = vmatpush2.bf16.xpose.msra.mxu0 0
    %47 = vmatprep.subr.bf16.mxu0 0
    %48 = vmatpush2.bf16.xpose.msra.mxu0 0
    %49 = vmatprep.subr.bf16.mxu0 0
    %50 = vmatpush2.bf16.xpose.msra.mxu0 0
    %51 = vmatprep.subr.bf16.mxu0 0
    %52 = vmatpush2.bf16.xpose.msra.mxu0 0
    %53 = vmatprep.mubr.bf16.mxu0 0
    %54 = vmatmul.mubr.bf16.gmra.mxu0 %v19
    %v55 = vpop.f32.mrf.mxu0
    %v56 = vadd.f32 0.0, %v55
    %v57 = vpop.f32.mrf.mxu0
    %v58 = vpop.f32.mrf.mxu0
    %v59 = vpop.f32.mrf.mxu0
    %60 = vdwg.mxu0
    %v61 = vld [vmem:[%s2] sm:$0xf]
    %62 = vmatprep.subr.bf16.mxu0 0
    %63 = vmatpush1.bf16.xpose.msra.mxu0 0
    %64 = vmatprep.subr.bf16.mxu0 0
    %65 = vmatpush1.bf16.xpose.msra.mxu0 0
    %66 = vmatprep.subr.bf16.mxu0 0
    %67 = vmatpush1.bf16.xpose.msra.mxu0 0
    %68 = vmatprep.subr.bf16.mxu0 0
    %69 = vmatpush1.bf16.xpose.msra.mxu0 0
    %70 = vmatprep.subr.bf16.mxu0 0
    %71 = vmatpush1.bf16.xpose.msra.mxu0 0
    %72 = vmatprep.subr.bf16.mxu0 0
    %73 = vmatpush1.bf16.xpose.msra.mxu0 0
    %74 = vmatprep.subr.bf16.mxu0 0
    %75 = vmatpush1.bf16.xpose.msra.mxu0 0
    %76 = vmatprep.subr.bf16.mxu0 0
    %77 = vmatpush1.bf16.xpose.msra.mxu0 %v61
    %78 = vmatprep.subr.bf16.mxu0 0
    %79 = vmatpush2.bf16.xpose.msra.mxu0 0
    %80 = vmatprep.subr.bf16.mxu0 0
    %81 = vmatpush2.bf16.xpose.msra.mxu0 0
    %82 = vmatprep.subr.bf16.mxu0 0
    %83 = vmatpush2.bf16.xpose.msra.mxu0 0
    %84 = vmatprep.subr.bf16.mxu0 0
    %85 = vmatpush2.bf16.xpose.msra.mxu0 0
    %86 = vmatprep.subr.bf16.mxu0 0
    %87 = vmatpush2.bf16.xpose.msra.mxu0 0
    %88 = vmatprep.subr.bf16.mxu0 0
    %89 = vmatpush2.bf16.xpose.msra.mxu0 0
    %90 = vmatprep.subr.bf16.mxu0 0
    %91 = vmatpush2.bf16.xpose.msra.mxu0 0
    %92 = vmatprep.subr.bf16.mxu0 0
    %93 = vmatpush2.bf16.xpose.msra.mxu0 0
    %94 = vmatprep.mubr.bf16.mxu0 0
    %95 = vmatmul.mubr.bf16.gmra.mxu0 %v19
    %v96 = vpop.f32.mrf.mxu0
    %v97 = vadd.f32 0.0, %v96
    %v98 = vpop.f32.mrf.mxu0
    %v99 = vpop.f32.mrf.mxu0
    %v100 = vpop.f32.mrf.mxu0
    %101 = vdwg.mxu0
    %v102 = vlaneseq
    %v103 = vshrl.u32 %v102, 7
    %v104 = vlaneseq
    %v105 = vand.u32 %v104, 127
    %vm106 = vcmp.ne.s32.totalorder %v105, %v103
    %v107 = vsel %vm106, %v56, -1e+30
    %v108 = vsel %vm106, %v97, -1e+30
    %vm109 = vcmask 64512
    %v110 = vsel %vm109, %v107, -inf
    %111 = vmax.xlane.f32.xlu0 %v110
    %v112 = vpop.xlane.xlu0 %111
    %v113 = vsel %vm109, %v108, -inf
    %114 = vmax.xlane.f32.xlu0 %v113
    %v115 = vpop.xlane.xlu0 %114
    %v116 = vmax.f32 %v112, %v115
    %v117 = vsub.f32 %v107, %v116
    %v118 = vmul.f32 %v117, 1.442695
    %v119 = vpow.pop %v118
    %v120 = vsel %vm109, %v119, 0.0
    %121 = vadd.xlane.f32.xlu0 %v120
    %v122 = vpop.xlane.xlu0 %121
    %v123 = vsub.f32 %v108, %v116
    %v124 = vmul.f32 %v123, 1.442695
    %v125 = vpow.pop %v124
    %v126 = vsel %vm109, %v125, 0.0
    %127 = vadd.xlane.f32.xlu0 %v126
    %v128 = vpop.xlane.xlu0 %127
    %v129 = vadd.f32 %v122, %v128
    %v130 = vld [vmem:[%s3] sm:$0xff]
    %v131 = vmul.f32 %v130, 4.0
    %v132 = vsub.f32 %v116, %v131
    %v133 = vsub.f32 0.0, %v132
    %v134 = vmul.f32 %v133, 1.442695
    %v135 = vpow.pop %v134
    %v136 = vadd.f32 %v135, %v129
    %v137 = vlog2.pop %v136
    %v138 = vmul.f32 %v137, 0.6931472
    %v139 = vadd.f32 %v132, %v138
    %vm140 = vcmask 7168
    %v141 = vsel %vm140, %v139, 0.0
    %142 = vadd.xlane.f32.xlu0 %v141
    %v143 = vpop.xlane.xlu0 %142
    %v144 = vrot.slane %v143, 4
    %v145 = vadd.f32 %v143, %v144
    %v146 = vrot.slane %v145, 2
    %v147 = vadd.f32 %v145, %v146
    %v148 = vrot.slane %v147, 1
    %v149 = vadd.f32 %v147, %v148
    %s150 = vtos %v149
    %v151 = vrcp.pop 8.0
    %s152 = vtos %v151
    %s153 = smul.f32 %s150, %s152
    %s154 = scalar_lea.smem [#allocation2], 0
    %155 = sst [smem:[%s154]] %s153
    // Predicated region
    $region18: #{tpu_custom_call.1} parent=1 // pred_check
      _
    $region19: #{tpu_custom_call.1} parent=1 // pred_check_branch
      %157 = sbr.rel (0) target = $region21
    $region20: #{tpu_custom_call.1} parent=1 // pred_region
      %s159 = ssub.s32 16, 16
      %160 = vsyncadd [#allocation3], %s159
      %163 = dma.smem_to_hbm [#allocation2], 16, %s4, [#allocation3]
    $region21: #{tpu_custom_call.1} parent=1 // pred_fallthru
      _
    // Predicated region
    $region22: #{tpu_custom_call.1} parent=1 // pred_check
      _
    $region23: #{tpu_custom_call.1} parent=1 // pred_check_branch
      %165 = sbr.rel (0) target = $region25
    $region24: #{tpu_custom_call.1} parent=1 // pred_region
      %166 = dma.done [#allocation3], 16
    $region25: #{tpu_custom_call.1} parent=1 // pred_fallthru
      _
    %167 = sfence
    %168 = vsyncpa [#allocation3], 1

</llo_original>
